<compile_context>
chip_gen: v7x
topology: tpu7x:2x2x1
jax: 0.10.0
libtpu: 0.0.40
codegen_flags: <defaults>
</compile_context>

<pallas_src>
import functools

import numpy as np
import jax
import jax.numpy as jnp
from jax.experimental import pallas as pl
from jax.experimental.pallas import tpu as pltpu

EPS = 1e-10
LOG10_INV = float(1.0 / np.log(10.0))
_LANE = 128
_MAX_TILE = 8192  # lanes per spatial tile (multiple of 128); ~c*32 KiB / block


def _round_up(x, m):
    return (x + m - 1) // m * m


def _fciou_kernel(pred_ref, ann_ref, loss_ref, cnt_ref,
                  num_acc, p2_acc, cnt_acc,
                  *, c, tile, hw, needs_mask):
    # pred_ref: (1, C, T) f32   ann_ref: (1, 1, T) i32
    # loss_ref/cnt_ref: (1, C, 1) f32 (written only on the last spatial tile)
    # *_acc: (C, 128) f32 VMEM accumulators, live across the spatial grid axis.
    k = pl.program_id(1)

    @pl.when(k == 0)
    def _():
        num_acc[...] = jnp.zeros_like(num_acc)
        p2_acc[...] = jnp.zeros_like(p2_acc)
        cnt_acc[...] = jnp.zeros_like(cnt_acc)

    x = pred_ref[0]                                    # (C, T)

    # Numerically-stable softmax over the channel (sublane) axis.  The divide
    # is hoisted: one exact reciprocal per lane instead of one per element.
    m = jnp.max(x, axis=0, keepdims=True)              # (1, T)
    e = jnp.exp(x - m)                                 # (C, T)
    s = jnp.sum(e, axis=0, keepdims=True)              # (1, T)
    inv_s = pl.reciprocal(s)                           # exact
    p = e * inv_s + EPS                                # (C, T)

    ann = ann_ref[0].astype(jnp.int32)                 # (1, T)
    cls = jax.lax.broadcasted_iota(jnp.int32, (c, tile), 0)
    mask = cls == ann                                  # (C, T) bool

    p2 = p * p
    if needs_mask:
        # Last tile may extend past hw (padding / non-divisible grid): keep
        # padded lanes out of every accumulator.
        lane = jax.lax.broadcasted_iota(jnp.int32, (1, tile), 1) + k * tile
        valid = lane < hw                              # (1, T)
        mask = jnp.logical_and(mask, valid)
        p2 = jnp.where(valid, p2, 0.0)

    num = jnp.where(mask, p, 0.0)                      # p where ann == class
    cnt = jnp.where(mask, 1.0, 0.0)                    # per-class pixel count

    # Fold (C, T) -> (C, 128) with static 128-aligned lane slices (pure VPU
    # adds, no relayout).  The single 128->1 cross-lane reduce is deferred to
    # the finalize step below, keeping the XLU slot free in the hot loop.
    def fold(v):
        r = v[:, 0:_LANE]
        for j in range(1, tile // _LANE):
            r = r + v[:, j * _LANE:(j + 1) * _LANE]
        return r

    num_acc[...] += fold(num)
    p2_acc[...] += fold(p2)
    cnt_acc[...] += fold(cnt)

    @pl.when(k == pl.num_programs(1) - 1)
    def _():
        num_s = jnp.sum(num_acc[...], axis=1, keepdims=True)   # (C, 1)
        p2_s = jnp.sum(p2_acc[...], axis=1, keepdims=True)     # (C, 1)
        cnt_s = jnp.sum(cnt_acc[...], axis=1, keepdims=True)   # (C, 1)
        # denom = sum(p^2 + onehot - p*onehot) = sum(p^2) + count - sum(num)
        den_s = p2_s + cnt_s - num_s
        iou = num_s / den_s
        # -log10(sqrt(iou + eps) + eps)
        loss_ref[0] = -(jnp.log(jnp.sqrt(iou + EPS) + EPS) * LOG10_INV)
        cnt_ref[0] = cnt_s


def fciou_v2(pred, ann):
    """pred: (b, c, h, w) float logits, ann: (b, h, w) integer labels -> (b,)."""
    b, c, h, w = pred.shape
    hw = h * w
    hw_p = _round_up(hw, _LANE)                 # lane-align the spatial axis
    tile = min(hw_p, _MAX_TILE)                 # multiple of 128 by design
    n_tiles = pl.cdiv(hw_p, tile)
    needs_mask = (hw_p != hw) or (hw_p % tile != 0)

    pred_f = pred.reshape(b, c, hw).astype(jnp.float32)
    ann_i = ann.reshape(b, 1, hw).astype(jnp.int32)
    if hw_p != hw:
        pad = hw_p - hw
        pred_f = jnp.pad(pred_f, ((0, 0), (0, 0), (0, pad)))
        ann_i = jnp.pad(ann_i, ((0, 0), (0, 0), (0, pad)), constant_values=-1)

    kernel = functools.partial(_fciou_kernel, c=c, tile=tile, hw=hw,
                               needs_mask=needs_mask)

    loss_bc1, cnt_bc1 = pl.pallas_call(
        kernel,
        out_shape=(jax.ShapeDtypeStruct((b, c, 1), jnp.float32),
                   jax.ShapeDtypeStruct((b, c, 1), jnp.float32)),
        grid_spec=pltpu.PrefetchScalarGridSpec(
            num_scalar_prefetch=0,
            grid=(b, n_tiles),
            in_specs=[pl.BlockSpec((1, c, tile), lambda i, k: (i, 0, k)),
                      pl.BlockSpec((1, 1, tile), lambda i, k: (i, 0, k))],
            # Output block index constant over k -> resident accumulator,
            # written only on the last spatial tile.
            out_specs=[pl.BlockSpec((1, c, 1), lambda i, k: (i, 0, 0)),
                       pl.BlockSpec((1, c, 1), lambda i, k: (i, 0, 0))],
            scratch_shapes=[pltpu.VMEM((c, _LANE), jnp.float32),
                            pltpu.VMEM((c, _LANE), jnp.float32),
                            pltpu.VMEM((c, _LANE), jnp.float32)]),
        compiler_params=pltpu.CompilerParams(
            dimension_semantics=("parallel", "arbitrary"),
            vmem_limit_bytes=32 * 1024 * 1024),
    )(pred_f, ann_i)

    loss = loss_bc1[..., 0]                     # (b, c)
    counts = cnt_bc1[..., 0]                    # (b, c)

    # PyTorch quirk: a class absent from the WHOLE annotation tensor zeroes the
    # loss only in batch-row 0.
    present = jnp.sum(counts, axis=0) > 0.0     # (c,)
    loss = loss.at[0].set(jnp.where(present, loss[0], 0.0))
    return jnp.sum(loss, axis=1)                # (b,)


def _ref_fciou(pred, ann):
    """Pure-JAX reference mirroring the PyTorch forward."""
    b, c, h, w = pred.shape
    p = jax.nn.softmax(pred.astype(jnp.float32), axis=1) + EPS
    onehot = (ann[:, None, :, :] == jnp.arange(c)[None, :, None, None]
              ).astype(jnp.float32)
    num = (p * onehot).sum(axis=(2, 3))
    denom = (p * p + onehot - p * onehot).sum(axis=(2, 3))
    iou = num / denom
    loss = -jnp.log10(jnp.sqrt(iou + EPS) + EPS)
    present = onehot.sum(axis=(0, 2, 3)) > 0.0
    loss = loss.at[0].set(jnp.where(present, loss[0], 0.0))
    return loss.sum(axis=1)


if __name__ == "__main__":
    key = jax.random.PRNGKey(0)
    k_pred, k_ann = jax.random.split(key)

    b, c, h, w = 2, 4, 16, 16
    pred = jax.random.normal(k_pred, (b, c, h, w), dtype=jnp.float32)
    # use only a subset of classes so the "absent class -> zero" path is hit
    ann = jax.random.randint(k_ann, (b, h, w), 0, c - 1, dtype=jnp.int32)

    out = jax.block_until_ready(fciou_v2(pred, ann))
    ref = jax.block_until_ready(_ref_fciou(pred, ann))

    np.testing.assert_allclose(np.asarray(out), np.asarray(ref),
                               rtol=1e-4, atol=1e-5)
    print("KERNEL_OK")
</pallas_src>

<mosaic_0001>
module attributes {stable_mosaic.version = 11 : i64} {
  func.func @_fciou_kernel(%arg0: i32, %arg1: i32, %arg2: memref<1x4x256xf32, #tpu.memory_space<vmem>>, %arg3: memref<1x1x256xi32, #tpu.memory_space<vmem>>, %arg4: memref<1x4x1xf32, #tpu.memory_space<vmem>>, %arg5: memref<1x4x1xf32, #tpu.memory_space<vmem>>, %arg6: memref<4x128xf32, #tpu.memory_space<vmem>>, %arg7: memref<4x128xf32, #tpu.memory_space<vmem>>, %arg8: memref<4x128xf32, #tpu.memory_space<vmem>>) attributes {dimension_semantics = [#tpu.dimension_semantics<parallel>, #tpu.dimension_semantics<arbitrary>], iteration_bounds = array<i64: 2, 1>, scalar_prefetch = 0 : i64, scratch_operands = 3 : i64, tpu.core_type = #tpu.core_type<tc>, window_params = [{transform_indices = @transform_0, window_bounds = array<i64: 1, 4, 256>}, {transform_indices = @transform_1, window_bounds = array<i64: 1, 1, 256>}, {transform_indices = @transform_2, window_bounds = array<i64: 1, 4, 1>}, {transform_indices = @transform_3, window_bounds = array<i64: 1, 4, 1>}]} {
    %c0_i32 = arith.constant 0 : i32
    %0 = arith.cmpi eq, %arg1, %c0_i32 : i32
    %1 = arith.extui %0 : i1 to i32
    %c0_i32_0 = arith.constant 0 : i32
    %2 = arith.cmpi ne, %1, %c0_i32_0 : i32
    scf.if %2 {
      %cst_25 = arith.constant 0.000000e+00 : f32
      %49 = vector.broadcast %cst_25 : f32 to vector<4x128xf32>
      %c0_26 = arith.constant 0 : index
      %c0_27 = arith.constant 0 : index
      %50 = vector.load %arg6[%c0_26, %c0_27] : memref<4x128xf32, #tpu.memory_space<vmem>>, vector<4x128xf32>
      tpu.vector_store %arg6[%c0_26, %c0_27], %49 {strides = array<i32>} : memref<4x128xf32, #tpu.memory_space<vmem>>, vector<4x128xf32>,
      %cst_28 = arith.constant 0.000000e+00 : f32
      %51 = vector.broadcast %cst_28 : f32 to vector<4x128xf32>
      %c0_29 = arith.constant 0 : index
      %c0_30 = arith.constant 0 : index
      %52 = vector.load %arg7[%c0_29, %c0_30] : memref<4x128xf32, #tpu.memory_space<vmem>>, vector<4x128xf32>
      tpu.vector_store %arg7[%c0_29, %c0_30], %51 {strides = array<i32>} : memref<4x128xf32, #tpu.memory_space<vmem>>, vector<4x128xf32>,
      %cst_31 = arith.constant 0.000000e+00 : f32
      %53 = vector.broadcast %cst_31 : f32 to vector<4x128xf32>
      %c0_32 = arith.constant 0 : index
      %c0_33 = arith.constant 0 : index
      %54 = vector.load %arg8[%c0_32, %c0_33] : memref<4x128xf32, #tpu.memory_space<vmem>>, vector<4x128xf32>
      tpu.vector_store %arg8[%c0_32, %c0_33], %53 {strides = array<i32>} : memref<4x128xf32, #tpu.memory_space<vmem>>, vector<4x128xf32>,
    } else {
    }
    %c0 = arith.constant 0 : index
    %c0_1 = arith.constant 0 : index
    %c0_2 = arith.constant 0 : index
    %3 = vector.load %arg2[%c0, %c0_1, %c0_2] : memref<1x4x256xf32, #tpu.memory_space<vmem>>, vector<1x4x256xf32>
    %4 = vector.shape_cast %3 : vector<1x4x256xf32> to vector<4x256xf32>
    %cst = arith.constant dense<0xFF800000> : vector<256xf32>
    %5 = vector.multi_reduction <maximumf>, %4, %cst [0] : vector<4x256xf32> to vector<256xf32>
    %6 = vector.shape_cast %5 : vector<256xf32> to vector<1x256xf32>
    %7 = vector.broadcast %6 : vector<1x256xf32> to vector<4x256xf32>
    %8 = arith.subf %4, %7 : vector<4x256xf32>
    %9 = math.exp %8 : vector<4x256xf32>
    %cst_3 = arith.constant dense<0.000000e+00> : vector<256xf32>
    %10 = vector.multi_reduction <add>, %9, %cst_3 [0] : vector<4x256xf32> to vector<256xf32>
    %11 = vector.shape_cast %10 : vector<256xf32> to vector<1x256xf32>
    %12 = tpu.reciprocal %11 : vector<1x256xf32> -> vector<1x256xf32>
    %13 = vector.broadcast %12 : vector<1x256xf32> to vector<4x256xf32>
    %14 = arith.mulf %9, %13 : vector<4x256xf32>
    %cst_4 = arith.constant 1.000000e-10 : f32
    %15 = vector.broadcast %cst_4 : f32 to vector<4x256xf32>
    %16 = arith.addf %14, %15 : vector<4x256xf32>
    %c0_5 = arith.constant 0 : index
    %c0_6 = arith.constant 0 : index
    %c0_7 = arith.constant 0 : index
    %17 = vector.load %arg3[%c0_5, %c0_6, %c0_7] : memref<1x1x256xi32, #tpu.memory_space<vmem>>, vector<1x1x256xi32>
    %18 = vector.shape_cast %17 : vector<1x1x256xi32> to vector<1x256xi32>
    %19 = tpu.iota {dimensions = array<i32: 0>} : vector<4x256xi32>
    %20 = vector.broadcast %18 : vector<1x256xi32> to vector<4x256xi32>
    %21 = arith.cmpi eq, %19, %20 : vector<4x256xi32>
    %22 = arith.mulf %16, %16 : vector<4x256xf32>
    %cst_8 = arith.constant 0.000000e+00 : f32
    %23 = vector.broadcast %cst_8 : f32 to vector<4x256xf32>
    %24 = arith.select %21, %16, %23 : vector<4x256xi1>, vector<4x256xf32>
    %cst_9 = arith.constant 1.000000e+00 : f32
    %cst_10 = arith.constant 0.000000e+00 : f32
    %25 = vector.broadcast %cst_9 : f32 to vector<4x256xf32>
    %26 = vector.broadcast %cst_10 : f32 to vector<4x256xf32>
    %27 = arith.select %21, %25, %26 : vector<4x256xi1>, vector<4x256xf32>
    %c0_11 = arith.constant 0 : index
    %c0_12 = arith.constant 0 : index
    %28 = vector.load %arg6[%c0_11, %c0_12] : memref<4x128xf32, #tpu.memory_space<vmem>>, vector<4x128xf32>
    %29 = vector.extract_strided_slice %24 {offsets = [0, 0], sizes = [4, 128], strides = [1, 1]} : vector<4x256xf32> to vector<4x128xf32>
    %30 = vector.extract_strided_slice %24 {offsets = [0, 128], sizes = [4, 128], strides = [1, 1]} : vector<4x256xf32> to vector<4x128xf32>
    %31 = arith.addf %29, %30 : vector<4x128xf32>
    %32 = arith.addf %28, %31 : vector<4x128xf32>
    %c0_13 = arith.constant 0 : index
    %c0_14 = arith.constant 0 : index
    %33 = vector.load %arg6[%c0_13, %c0_14] : memref<4x128xf32, #tpu.memory_space<vmem>>, vector<4x128xf32>
    tpu.vector_store %arg6[%c0_13, %c0_14], %32 {strides = array<i32>} : memref<4x128xf32, #tpu.memory_space<vmem>>, vector<4x128xf32>,
    %c0_15 = arith.constant 0 : index
    %c0_16 = arith.constant 0 : index
    %34 = vector.load %arg7[%c0_15, %c0_16] : memref<4x128xf32, #tpu.memory_space<vmem>>, vector<4x128xf32>
    %35 = vector.extract_strided_slice %22 {offsets = [0, 0], sizes = [4, 128], strides = [1, 1]} : vector<4x256xf32> to vector<4x128xf32>
    %36 = vector.extract_strided_slice %22 {offsets = [0, 128], sizes = [4, 128], strides = [1, 1]} : vector<4x256xf32> to vector<4x128xf32>
    %37 = arith.addf %35, %36 : vector<4x128xf32>
    %38 = arith.addf %34, %37 : vector<4x128xf32>
    %c0_17 = arith.constant 0 : index
    %c0_18 = arith.constant 0 : index
    %39 = vector.load %arg7[%c0_17, %c0_18] : memref<4x128xf32, #tpu.memory_space<vmem>>, vector<4x128xf32>
    tpu.vector_store %arg7[%c0_17, %c0_18], %38 {strides = array<i32>} : memref<4x128xf32, #tpu.memory_space<vmem>>, vector<4x128xf32>,
    %c0_19 = arith.constant 0 : index
    %c0_20 = arith.constant 0 : index
    %40 = vector.load %arg8[%c0_19, %c0_20] : memref<4x128xf32, #tpu.memory_space<vmem>>, vector<4x128xf32>
    %41 = vector.extract_strided_slice %27 {offsets = [0, 0], sizes = [4, 128], strides = [1, 1]} : vector<4x256xf32> to vector<4x128xf32>
    %42 = vector.extract_strided_slice %27 {offsets = [0, 128], sizes = [4, 128], strides = [1, 1]} : vector<4x256xf32> to vector<4x128xf32>
    %43 = arith.addf %41, %42 : vector<4x128xf32>
    %44 = arith.addf %40, %43 : vector<4x128xf32>
    %c0_21 = arith.constant 0 : index
    %c0_22 = arith.constant 0 : index
    %45 = vector.load %arg8[%c0_21, %c0_22] : memref<4x128xf32, #tpu.memory_space<vmem>>, vector<4x128xf32>
    tpu.vector_store %arg8[%c0_21, %c0_22], %44 {strides = array<i32>} : memref<4x128xf32, #tpu.memory_space<vmem>>, vector<4x128xf32>,
    %c0_i32_23 = arith.constant 0 : i32
    %46 = arith.cmpi eq, %arg1, %c0_i32_23 : i32
    %47 = arith.extui %46 : i1 to i32
    %c0_i32_24 = arith.constant 0 : i32
    %48 = arith.cmpi ne, %47, %c0_i32_24 : i32
    scf.if %48 {
      %c0_25 = arith.constant 0 : index
      %c0_26 = arith.constant 0 : index
      %49 = vector.load %arg6[%c0_25, %c0_26] : memref<4x128xf32, #tpu.memory_space<vmem>>, vector<4x128xf32>
      %cst_27 = arith.constant dense<0.000000e+00> : vector<4xf32>
      %50 = vector.multi_reduction <add>, %49, %cst_27 [1] : vector<4x128xf32> to vector<4xf32>
      %51 = vector.shape_cast %50 : vector<4xf32> to vector<4x1xf32>
      %c0_28 = arith.constant 0 : index
      %c0_29 = arith.constant 0 : index
      %52 = vector.load %arg7[%c0_28, %c0_29] : memref<4x128xf32, #tpu.memory_space<vmem>>, vector<4x128xf32>
      %cst_30 = arith.constant dense<0.000000e+00> : vector<4xf32>
      %53 = vector.multi_reduction <add>, %52, %cst_30 [1] : vector<4x128xf32> to vector<4xf32>
      %54 = vector.shape_cast %53 : vector<4xf32> to vector<4x1xf32>
      %c0_31 = arith.constant 0 : index
      %c0_32 = arith.constant 0 : index
      %55 = vector.load %arg8[%c0_31, %c0_32] : memref<4x128xf32, #tpu.memory_space<vmem>>, vector<4x128xf32>
      %cst_33 = arith.constant dense<0.000000e+00> : vector<4xf32>
      %56 = vector.multi_reduction <add>, %55, %cst_33 [1] : vector<4x128xf32> to vector<4xf32>
      %57 = vector.shape_cast %56 : vector<4xf32> to vector<4x1xf32>
      %58 = arith.addf %54, %57 : vector<4x1xf32>
      %59 = arith.subf %58, %51 : vector<4x1xf32>
      %60 = arith.divf %51, %59 : vector<4x1xf32>
      %cst_34 = arith.constant 1.000000e-10 : f32
      %61 = vector.broadcast %cst_34 : f32 to vector<4x1xf32>
      %62 = arith.addf %60, %61 : vector<4x1xf32>
      %63 = math.sqrt %62 : vector<4x1xf32>
      %cst_35 = arith.constant 1.000000e-10 : f32
      %64 = vector.broadcast %cst_35 : f32 to vector<4x1xf32>
      %65 = arith.addf %63, %64 : vector<4x1xf32>
      %66 = math.log %65 : vector<4x1xf32>
      %cst_36 = arith.constant 0.434294492 : f32
      %67 = vector.broadcast %cst_36 : f32 to vector<4x1xf32>
      %68 = arith.mulf %66, %67 : vector<4x1xf32>
      %cst_37 = arith.constant 0.000000e+00 : f32
      %69 = vector.broadcast %cst_37 : f32 to vector<4x1xf32>
      %70 = arith.subf %69, %68 : vector<4x1xf32>
      %c0_38 = arith.constant 0 : index
      %c0_39 = arith.constant 0 : index
      %c0_40 = arith.constant 0 : index
      %71 = vector.load %arg4[%c0_38, %c0_39, %c0_40] : memref<1x4x1xf32, #tpu.memory_space<vmem>>, vector<1x4x1xf32>
      %72 = vector.shape_cast %71 : vector<1x4x1xf32> to vector<4x1xf32>
      %73 = vector.shape_cast %70 : vector<4x1xf32> to vector<1x4x1xf32>
      tpu.vector_store %arg4[%c0_38, %c0_39, %c0_40], %73 {strides = array<i32>} : memref<1x4x1xf32, #tpu.memory_space<vmem>>, vector<1x4x1xf32>,
      %c0_41 = arith.constant 0 : index
      %c0_42 = arith.constant 0 : index
      %c0_43 = arith.constant 0 : index
      %74 = vector.load %arg5[%c0_41, %c0_42, %c0_43] : memref<1x4x1xf32, #tpu.memory_space<vmem>>, vector<1x4x1xf32>
      %75 = vector.shape_cast %74 : vector<1x4x1xf32> to vector<4x1xf32>
      %76 = vector.shape_cast %57 : vector<4x1xf32> to vector<1x4x1xf32>
      tpu.vector_store %arg5[%c0_41, %c0_42, %c0_43], %76 {strides = array<i32>} : memref<1x4x1xf32, #tpu.memory_space<vmem>>, vector<1x4x1xf32>,
    } else {
    }
    return
  }
  func.func @transform_0(%arg0: i32, %arg1: i32) -> (i32, i32, i32) {
    %c0_i32 = arith.constant 0 : i32
    %c0_i32_0 = arith.constant 0 : i32
    return %arg0, %c0_i32, %arg1 : i32, i32, i32
  }
  func.func @transform_1(%arg0: i32, %arg1: i32) -> (i32, i32, i32) {
    %c0_i32 = arith.constant 0 : i32
    %c0_i32_0 = arith.constant 0 : i32
    return %arg0, %c0_i32, %arg1 : i32, i32, i32
  }
  func.func @transform_2(%arg0: i32, %arg1: i32) -> (i32, i32, i32) {
    %c0_i32 = arith.constant 0 : i32
    %c0_i32_0 = arith.constant 0 : i32
    %c0_i32_1 = arith.constant 0 : i32
    return %arg0, %c0_i32, %c0_i32_0 : i32, i32, i32
  }
  func.func @transform_3(%arg0: i32, %arg1: i32) -> (i32, i32, i32) {
    %c0_i32 = arith.constant 0 : i32
    %c0_i32_0 = arith.constant 0 : i32
    %c0_i32_1 = arith.constant 0 : i32
    return %arg0, %c0_i32, %c0_i32_0 : i32, i32, i32
  }
}

</mosaic_0001>

<llo_original>
// kernel: tpu_custom_call.1
$region0: #{tpu_custom_call.1}
  #allocation0 [shape = 'u32[]', space=smem, size = 0x4, offset = 0x4, fixed_abs, tag = 'smem constant byte address 0x4 - core index']
  #allocation1 [shape = 'u32[144,128]{1,0:T(1,128)}', space=vmem, size = 0x12000, scoped, tag = 'internal scratch']
  #allocation2 [shape = 'f32[4,128]{1,0:T(4,128)}', space=vmem, size = 0x800, scoped, tag = 'scratch operand']
  #allocation3 [shape = 'f32[4,128]{1,0:T(4,128)}', space=vmem, size = 0x800, scoped, tag = 'scratch operand']
  #allocation4 [shape = 'f32[4,128]{1,0:T(4,128)}', space=vmem, size = 0x800, scoped, tag = 'scratch operand']
  %s0 = inlined_call_operand.hbm [shape: f32[2,4,256], index: 0, kind: input, shape index: {}]
  %s1 = inlined_call_operand.hbm [shape: s32[2,1,256], index: 1, kind: input, shape index: {}]
  %s2 = inlined_call_operand.vmem [shape: f32[2,4,1], index: 2, kind: output, shape index: {0}]
  %s3 = inlined_call_operand.vmem [shape: f32[2,4,1], index: 3, kind: output, shape index: {1}]
  %4 = xla_tuple %s2, %s3
  %s5 = sld [smem:[#allocation0]]
  $region65: #{tpu_custom_call.1} parent=0
    _
  %s7 = ssub.s32 1, %s5
  %s8 = scalar_select 0, %s7, %s5
  $region1: #{tpu_custom_call.1} parent=0
    #allocation5 [shape = 'u8[8192]{0}', space=vmem, size = 0x2000, scoped, tag = 'input window, operand 0']
    #allocation6 [shape = 's32[2]{0}', space=sflag, size = 0x8, scoped, tag = 'scoped memory for tpu_custom_call.1']
    #allocation7 [shape = 'u8[2048]{0}', space=vmem, size = 0x800, scoped, tag = 'input window, operand 1']
    #allocation8 [shape = 's32[2]{0}', space=sflag, size = 0x8, scoped, tag = 'scoped memory for tpu_custom_call.1']
    %9 = vsyncpa [#allocation6], 0
    %s10 = scalar_lea.sflag [#allocation6], 1
    %11 = vsyncpa %s10, 0
    %12 = vsyncpa [#allocation8], 0
    %s13 = scalar_lea.sflag [#allocation8], 1
    %14 = vsyncpa %s13, 0
    loop: start=0, step=1, limit=4
    $region2: #{tpu_custom_call.1} parent=1 // loop_pre_header
      _
    $region3: #{tpu_custom_call.1} parent=1 // loop_header
      %s16 = sphi 0, %s20
      %p17 = scmp.ge.s32.totalorder %s16, 4
      %s23 = sphi 0, %s35
      %s24 = sphi 0, %s31
      %s25 = sphi 0, %s23
      %s26 = sphi 0, %s24
      %s27 = sphi 0, %s25
      %s28 = sphi 0, %s26
      %s40 = sphi 0, %s42
      %s43 = sphi 0, %s40
      %s44 = sphi 0, %s43
      %s60 = sphi 0, %s44
      %s68 = sphi 0, %s70
      %s71 = sphi 0, %s68
      %s72 = sphi 0, %s71
      %s88 = sphi 0, %s72
      %s94 = sphi 0, %s96
      %s97 = sphi 0, %s94
      %s98 = sphi 0, %s97
      %s114 = sphi 0, %s98
      %s120 = sphi 0, %s122
      %s123 = sphi 0, %s120
      %s124 = sphi 0, %s123
      %s140 = sphi 0, %s124
    $region4: #{tpu_custom_call.1} parent=1 // loop_header_branch
      %19 = sbr.rel (%p17) target = $region8
    $region5: #{tpu_custom_call.1} parent=1 // loop_body
      %s21 = ssub.s32 %s16, 1
      %s22 = ssub.s32 %s16, 2
      %s29 = sadd.s32 1, %s24
      %p30 = scmp.ge.s32.totalorder %s29, 1
      %s31 = scalar_select %p30, 0, %s29
      %s32 = sadd.s32 1, %s23
      %s33 = scalar_select %p30, %s32, %s23
      %p34 = scmp.ge.s32.totalorder %s33, 2
      %s35 = scalar_select %p34, 0, %s33
      %s36 = ssub.s32 %s23, %s35
      %s37 = ssub.s32 %s24, %s31
      %s38 = sor.u32 %s36, %s37
      %p39 = scmp.eq.s32.totalorder %s38, 0
      %s41 = sadd.s32 %s40, 1
      %s42 = scalar_select %p39, %s40, %s41
      %p45 = pneg %p39
      %p46 = scmp.eq.s32.totalorder %s16, 1
      %p47 = por %p45, %p46
      %p48 = scmp.ne.s32.totalorder %s40, %s43
      %p49 = scmp.eq.s32.totalorder %s16, 0
      %p50 = por %p48, %p49
      %p51 = scmp.ne.s32.totalorder %s40, %s43
      %p52 = scmp.eq.s32.totalorder %s21, 1
      %p53 = por %p51, %p52
      %p54 = scmp.ne.s32.totalorder %s43, %s44
      %p55 = scmp.eq.s32.totalorder %s21, 0
      %p56 = por %p54, %p55
      %p57 = scmp.ne.s32.totalorder %s43, %s44
      %p58 = scmp.eq.s32.totalorder %s22, 1
      %p59 = por %p57, %p58
      %p61 = scmp.ne.s32.totalorder %s44, %s60
      %p62 = scmp.eq.s32.totalorder %s22, 0
      %p63 = por %p61, %p62
      %s64 = ssub.s32 %s23, %s35
      %s65 = ssub.s32 %s24, %s31
      %s66 = sor.u32 %s64, %s65
      %p67 = scmp.eq.s32.totalorder %s66, 0
      %s69 = sadd.s32 %s68, 1
      %s70 = scalar_select %p67, %s68, %s69
      %p73 = pneg %p67
      %p74 = scmp.eq.s32.totalorder %s16, 1
      %p75 = por %p73, %p74
      %p76 = scmp.ne.s32.totalorder %s68, %s71
      %p77 = scmp.eq.s32.totalorder %s16, 0
      %p78 = por %p76, %p77
      %p79 = scmp.ne.s32.totalorder %s68, %s71
      %p80 = scmp.eq.s32.totalorder %s21, 1
      %p81 = por %p79, %p80
      %p82 = scmp.ne.s32.totalorder %s71, %s72
      %p83 = scmp.eq.s32.totalorder %s21, 0
      %p84 = por %p82, %p83
      %p85 = scmp.ne.s32.totalorder %s71, %s72
      %p86 = scmp.eq.s32.totalorder %s22, 1
      %p87 = por %p85, %p86
      %p89 = scmp.ne.s32.totalorder %s72, %s88
      %p90 = scmp.eq.s32.totalorder %s22, 0
      %p91 = por %p89, %p90
      %s92 = ssub.s32 %s23, %s35
      %p93 = scmp.eq.s32.totalorder %s92, 0
      %s95 = sadd.s32 %s94, 1
      %s96 = scalar_select %p93, %s94, %s95
      %p99 = pneg %p93
      %p100 = scmp.eq.s32.totalorder %s16, 1
      %p101 = por %p99, %p100
      %p102 = scmp.ne.s32.totalorder %s94, %s97
      %p103 = scmp.eq.s32.totalorder %s16, 0
      %p104 = por %p102, %p103
      %p105 = scmp.ne.s32.totalorder %s94, %s97
      %p106 = scmp.eq.s32.totalorder %s21, 1
      %p107 = por %p105, %p106
      %p108 = scmp.ne.s32.totalorder %s97, %s98
      %p109 = scmp.eq.s32.totalorder %s21, 0
      %p110 = por %p108, %p109
      %p111 = scmp.ne.s32.totalorder %s97, %s98
      %p112 = scmp.eq.s32.totalorder %s22, 1
      %p113 = por %p111, %p112
      %p115 = scmp.ne.s32.totalorder %s98, %s114
      %p116 = scmp.eq.s32.totalorder %s22, 0
      %p117 = por %p115, %p116
      %s118 = ssub.s32 %s23, %s35
      %p119 = scmp.eq.s32.totalorder %s118, 0
      %s121 = sadd.s32 %s120, 1
      %s122 = scalar_select %p119, %s120, %s121
      %p125 = pneg %p119
      %p126 = scmp.eq.s32.totalorder %s16, 1
      %p127 = por %p125, %p126
      %p128 = scmp.ne.s32.totalorder %s120, %s123
      %p129 = scmp.eq.s32.totalorder %s16, 0
      %p130 = por %p128, %p129
      %p131 = scmp.ne.s32.totalorder %s120, %s123
      %p132 = scmp.eq.s32.totalorder %s21, 1
      %p133 = por %p131, %p132
      %p134 = scmp.ne.s32.totalorder %s123, %s124
      %p135 = scmp.eq.s32.totalorder %s21, 0
      %p136 = por %p134, %p135
      %p137 = scmp.ne.s32.totalorder %s123, %s124
      %p138 = scmp.eq.s32.totalorder %s22, 1
      %p139 = por %p137, %p138
      %p141 = scmp.ne.s32.totalorder %s124, %s140
      %p142 = scmp.eq.s32.totalorder %s22, 0
      %p143 = por %p141, %p142
      %p144 = scmp.le.s32.totalorder 1, %s16
      %p145 = scmp.lt.s32.totalorder %s16, 3
      %p146 = pnand %p144, %p145
      %p147 = pneg %p146
      // Predicated region
      $region9: #{tpu_custom_call.1} parent=5 // pred_check
        _
      $region10: #{tpu_custom_call.1} parent=5 // pred_check_branch
        %149 = sbr.rel (%p146) target = $region12
      $region11: #{tpu_custom_call.1} parent=5 // pred_region
        %s150 = ssub.s32 %s16, 1
      $region12: #{tpu_custom_call.1} parent=5 // pred_fallthru
        _
      %p151 = scmp.lt.s32.totalorder %s16, 2
      // Predicated region
      $region13: #{tpu_custom_call.1} parent=5 // pred_check
        %p152 = pneg %p151
      $region14: #{tpu_custom_call.1} parent=5 // pred_check_branch
        %154 = sbr.rel (%p152) target = $region16
      $region15: #{tpu_custom_call.1} parent=5 // pred_region
        // Predicated region
        $region17: #{tpu_custom_call.1} parent=15 // pred_check
          %p155 = pneg %p50
        $region18: #{tpu_custom_call.1} parent=15 // pred_check_branch
          %157 = sbr.rel (%p155) target = $region20
        $region19: #{tpu_custom_call.1} parent=15 // pred_region
          %s158 = sand.u32 %s40, 1
          %s159 = scalar_lea.sflag [#allocation6], %s158
          %s160 = sand.u32 %s40, 1
          %s161 = smul.addr %s160, 8
          %s162 = scalar_lea.vmem [#allocation5], %s161
          %s163 = smul.u32 2, %s24
          %s165 = ssub.s32 128, 128
          %166 = vsyncadd %s159, %s165
          %s167 = smul.addr %s23, 2
          %s168 = sadd.s32 %s163, %s167
          %s169 = smul.addr %s168, 64
          %s170 = scalar_lea.hbm %s0, %s169
          %s172 = sshll.u32 %s162, 4
          %s173 = int_to_ptr.vmem [resolvable:$true] %s172
          %175 = dma.hbm_to_vmem [thread:$0]  %s170, 128, %s173, %s159
        $region20: #{tpu_custom_call.1} parent=15 // pred_fallthru
          _
        // Predicated region
        $region21: #{tpu_custom_call.1} parent=15 // pred_check
          %p176 = pneg %p78
        $region22: #{tpu_custom_call.1} parent=15 // pred_check_branch
          %178 = sbr.rel (%p176) target = $region24
        $region23: #{tpu_custom_call.1} parent=15 // pred_region
          %s179 = sand.u32 %s68, 1
          %s180 = scalar_lea.sflag [#allocation8], %s179
          %s181 = sand.u32 %s68, 1
          %s182 = smul.addr %s181, 2
          %s183 = scalar_lea.vmem [#allocation7], %s182
          %s184 = smul.u32 2, %s24
          %s186 = ssub.s32 32, 32
          %187 = vsyncadd %s180, %s186
          %s188 = smul.addr %s23, 2
          %s189 = sadd.s32 %s184, %s188
          %s190 = smul.addr %s189, 16
          %s191 = scalar_lea.hbm %s1, %s190
          %s193 = sshll.u32 %s183, 4
          %s194 = int_to_ptr.vmem [resolvable:$true] %s193
          %196 = dma.hbm_to_vmem [thread:$0]  %s191, 32, %s194, %s180
        $region24: #{tpu_custom_call.1} parent=15 // pred_fallthru
          _
      $region16: #{tpu_custom_call.1} parent=5 // pred_fallthru
        _
      %p197 = scmp.le.s32.totalorder 1, %s16
      %p198 = scmp.lt.s32.totalorder %s16, 3
      %p199 = pnand %p197, %p198
      %p200 = pneg %p199
      // Predicated region
      $region25: #{tpu_custom_call.1} parent=5 // pred_check
        _
      $region26: #{tpu_custom_call.1} parent=5 // pred_check_branch
        %202 = sbr.rel (%p199) target = $region28
      $region27: #{tpu_custom_call.1} parent=5 // pred_region
        %s203 = ssub.s32 %s16, 1
        %s204 = sand.u32 %s43, 1
        %s205 = scalar_lea.sflag [#allocation6], %s204
        %s206 = sand.u32 %s43, 1
        %s207 = smul.addr %s206, 8
        %s208 = scalar_lea.vmem [#allocation5], %s207
        // Predicated region
        $region29: #{tpu_custom_call.1} parent=27 // pred_check
          %p209 = pneg %p56
        $region30: #{tpu_custom_call.1} parent=27 // pred_check_branch
          %211 = sbr.rel (%p209) target = $region32
        $region31: #{tpu_custom_call.1} parent=27 // pred_region
          %212 = dma.done %s205, 128
        $region32: #{tpu_custom_call.1} parent=27 // pred_fallthru
          _
        %s213 = sand.u32 %s71, 1
        %s214 = scalar_lea.sflag [#allocation8], %s213
        %s215 = sand.u32 %s71, 1
        %s216 = smul.addr %s215, 2
        %s217 = scalar_lea.vmem [#allocation7], %s216
        // Predicated region
        $region33: #{tpu_custom_call.1} parent=27 // pred_check
          %p218 = pneg %p84
        $region34: #{tpu_custom_call.1} parent=27 // pred_check_branch
          %220 = sbr.rel (%p218) target = $region36
        $region35: #{tpu_custom_call.1} parent=27 // pred_region
          %221 = dma.done %s214, 32
        $region36: #{tpu_custom_call.1} parent=27 // pred_fallthru
          _
        %s222 = sand.u32 %s43, 1
        %s223 = scalar_lea.sflag [#allocation6], %s222
        %s224 = sand.u32 %s43, 1
        %s225 = smul.addr %s224, 8
        %s226 = scalar_lea.vmem [#allocation5], %s225
        %p227 = pneg %p56
        %p228 = pneg %p53
        %s229 = sand.u32 %s71, 1
        %s230 = scalar_lea.sflag [#allocation8], %s229
        %s231 = sand.u32 %s71, 1
        %s232 = smul.addr %s231, 2
        %s233 = scalar_lea.vmem [#allocation7], %s232
        %p234 = pneg %p84
        %p235 = pneg %p81
        %p236 = pneg %p110
        %p237 = pneg %p107
        %p238 = scmp.lt.s32.totalorder %s25, 1
        %s239 = scalar_select %p238, %s25, 1
        %s240 = smul.addr %s239, 4
        %s241 = scalar_lea.vmem %s2, %s240
        %p242 = pneg %p136
        %p243 = pneg %p133
        %p244 = scmp.lt.s32.totalorder %s25, 1
        %s245 = scalar_select %p244, %s25, 1
        %s246 = smul.addr %s245, 4
        %s247 = scalar_lea.vmem %s3, %s246
        %s248 = smul.u32 2, %s26
        %s249 = smul.u32 2, %s26
        %p250 = scmp.lt.s32.totalorder %s25, 1
        %s251 = scalar_select %p250, %s25, 1
        %s252 = smul.addr %s251, 4
        %s253 = scalar_lea.vmem %s2, %s252
        %p254 = scmp.lt.s32.totalorder %s25, 1
        %s255 = scalar_select %p254, %s25, 1
        %s256 = smul.addr %s255, 4
        %s257 = scalar_lea.vmem %s3, %s256
        %p258 = scmp.eq.s32.totalorder %s26, 0
        // Predicated region
        $region37: #{tpu_custom_call.1} parent=27 // pred_check
          %p259 = pneg %p258
        $region38: #{tpu_custom_call.1} parent=27 // pred_check_branch
          %261 = sbr.rel (%p259) target = $region40
        $region39: #{tpu_custom_call.1} parent=27 // pred_region
          %262 = vst [vmem:[#allocation2] sm:$0xf] 0.0
          %263 = vst [vmem:[#allocation3] sm:$0xf] 0.0
          %264 = vst [vmem:[#allocation4] sm:$0xf] 0.0
        $region40: #{tpu_custom_call.1} parent=27 // pred_fallthru
          _
        %v265 = vld [vmem:[%s208] sm:$0xff]
        %v267 = vcombine.high %v265, %v265
        %vm269 = vcmask 1043456
        %v270 = vsel %vm269, %v265, -inf
        %v271 = vrot.slane %v270, 4
        %v272 = vmax.f32 %v270, %v271
        %v273 = vrot.slane %v272, 2
        %v274 = vmax.f32 %v272, %v273
        %v275 = vrot.slane %v274, 1
        %v276 = vmax.f32 %v274, %v275
        %v277 = vsel %vm269, %v267, -inf
        %v278 = vrot.slane %v277, 4
        %v279 = vmax.f32 %v277, %v278
        %v280 = vrot.slane %v279, 2
        %v281 = vmax.f32 %v279, %v280
        %v282 = vrot.slane %v281, 1
        %v283 = vmax.f32 %v281, %v282
        %v286 = vcombine.low %v276, %v283
        %v288 = vsub.f32 %v265, %v286
        %v289 = vmul.f32 %v288, 1.442695
        %v290 = vpow.pop %v289
        %v292 = vcombine.high %v290, %v290
        %v294 = vsel %vm269, %v290, 0.0
        %v295 = vrot.slane %v294, 4
        %v296 = vadd.f32 %v294, %v295
        %v297 = vrot.slane %v296, 2
        %v298 = vadd.f32 %v296, %v297
        %v299 = vrot.slane %v298, 1
        %v300 = vadd.f32 %v298, %v299
        %v301 = vsel %vm269, %v292, 0.0
        %v302 = vrot.slane %v301, 4
        %v303 = vadd.f32 %v301, %v302
        %v304 = vrot.slane %v303, 2
        %v305 = vadd.f32 %v303, %v304
        %v306 = vrot.slane %v305, 1
        %v307 = vadd.f32 %v305, %v306
        %v308 = vrcp.pop %v300
        %v309 = vrcp.pop %v307
        %v312 = vcombine.low %v308, %v309
        %v314 = vmul.f32 %v290, %v312
        %v315 = vadd.f32 %v314, 1e-10
        %v316 = vld [vmem:[%s217] sm:$0x3]
        %v317 = vlaneseq
        %v318 = vshrl.u32 %v317, 7
        %v319 = vlaneseq
        %v320 = vshrl.u32 %v319, 7
        %v321 = vsub.s32 0, %v320
        %v322 = vrot.slane %v316, %v321
        %v323 = vlaneseq
        %v324 = vshrl.u32 %v323, 7
        %v325 = vsub.s32 1, %v324
        %v326 = vrot.slane %v316, %v325
        %vm327 = vcmp.eq.s32.totalorder %v318, %v322
        %vm328 = vcmp.eq.s32.totalorder %v318, %v326
        %v329 = vmul.f32 %v315, %v315
        %v331 = vcombine.high %v315, %v315
        %v333 = vsel %vm327, %v315, 0.0
        %v334 = vsel %vm328, %v331, 0.0
        %v335 = vsel %vm327, 1.0, 0.0
        %v336 = vsel %vm328, 1.0, 0.0
        %v337 = vld [vmem:[#allocation2] sm:$0xf]
        %v338 = vadd.f32 %v333, %v334
        %v339 = vadd.f32 %v337, %v338
        %340 = vst [vmem:[#allocation2] sm:$0xf] %v339
        %v341 = vld [vmem:[#allocation3] sm:$0xf]
        %v343 = vrot.slane %v329, 4
        %v345 = vadd.f32 %v329, %v343
        %v346 = vadd.f32 %v341, %v345
        %347 = vst [vmem:[#allocation3] sm:$0xf] %v346
        %v348 = vld [vmem:[#allocation4] sm:$0xf]
        %v349 = vadd.f32 %v335, %v336
        %v350 = vadd.f32 %v348, %v349
        %351 = vst [vmem:[#allocation4] sm:$0xf] %v350
        // Predicated region
        $region41: #{tpu_custom_call.1} parent=27 // pred_check
          %p352 = pneg %p258
        $region42: #{tpu_custom_call.1} parent=27 // pred_check_branch
          %354 = sbr.rel (%p352) target = $region44
        $region43: #{tpu_custom_call.1} parent=27 // pred_region
          %v355 = vld [vmem:[#allocation2] sm:$0xf]
          %v356 = vsel %vm269, %v355, 0.0
          %357 = vadd.xlane.f32.xlu0 %v356
          %v358 = vpop.xlane.xlu0 %357
          %v359 = vld [vmem:[#allocation3] sm:$0xf]
          %v360 = vsel %vm269, %v359, 0.0
          %361 = vadd.xlane.f32.xlu0 %v360
          %v362 = vpop.xlane.xlu0 %361
          %v363 = vld [vmem:[#allocation4] sm:$0xf]
          %v364 = vsel %vm269, %v363, 0.0
          %365 = vadd.xlane.f32.xlu0 %v364
          %v366 = vpop.xlane.xlu0 %365
          %v367 = vadd.f32 %v362, %v366
          %v368 = vsub.f32 %v367, %v358
          %v369 = vrcp.pop %v368
          %v370 = vmul.f32 %v358, %v369
          %v371 = vadd.f32 %v370, 1e-10
          %v372 = vrsqrt.pop %v371
          %v373 = vmul.f32 %v371, %v372
          %vm374 = vcmp.eq.f32.partialorder %v371, inf
          %v375 = vsel %vm374, %v371, %v373
          %vm376 = vcmp.eq.f32.partialorder %v371, 0.0
          %v377 = vand.u32 %v371, 2147483648
          %v378 = vsel %vm376, %v377, %v375
          %v379 = vadd.f32 %v378, 1e-10
          %v380 = vlog2.pop %v379
          %v381 = vmul.f32 %v380, 0.6931472
          %v382 = vmul.f32 %v381, 0.4342945
          %v383 = vsub.f32 0.0, %v382
          %vm384 = vcmask 3072
          %385 = vst.msk [vmem:[%s253] sm:$0xf] %vm384, %v383
          %386 = vst.msk [vmem:[%s257] sm:$0xf] %vm384, %v366
        $region44: #{tpu_custom_call.1} parent=27 // pred_fallthru
          _
        %p387 = scmp.lt.s32.totalorder %s25, 1
        %s388 = scalar_select %p387, %s25, 1
        %s389 = smul.addr %s388, 4
        %s390 = scalar_lea.vmem %s2, %s389
        %p391 = scmp.lt.s32.totalorder %s25, 1
        %s392 = scalar_select %p391, %s25, 1
        %s393 = smul.addr %s392, 4
        %s394 = scalar_lea.vmem %s3, %s393
        // Predicated region
        $region45: #{tpu_custom_call.1} parent=27 // pred_check
          %p395 = pneg %p107
        $region46: #{tpu_custom_call.1} parent=27 // pred_check_branch
          %397 = sbr.rel (%p395) target = $region48
        $region47: #{tpu_custom_call.1} parent=27 // pred_region
          _
        $region48: #{tpu_custom_call.1} parent=27 // pred_fallthru
          _
        // Predicated region
        $region49: #{tpu_custom_call.1} parent=27 // pred_check
          %p398 = pneg %p133
        $region50: #{tpu_custom_call.1} parent=27 // pred_check_branch
          %400 = sbr.rel (%p398) target = $region52
        $region51: #{tpu_custom_call.1} parent=27 // pred_region
          _
        $region52: #{tpu_custom_call.1} parent=27 // pred_fallthru
          _
      $region28: #{tpu_custom_call.1} parent=5 // pred_fallthru
        _
      %p401 = scmp.le.s32.totalorder 2, %s16
      // Predicated region
      $region53: #{tpu_custom_call.1} parent=5 // pred_check
        %p402 = pneg %p401
      $region54: #{tpu_custom_call.1} parent=5 // pred_check_branch
        %404 = sbr.rel (%p402) target = $region56
      $region55: #{tpu_custom_call.1} parent=5 // pred_region
        %s405 = ssub.s32 %s16, 2
        // Predicated region
        $region57: #{tpu_custom_call.1} parent=55 // pred_check
          %p406 = pneg %p113
        $region58: #{tpu_custom_call.1} parent=55 // pred_check_branch
          %408 = sbr.rel (%p406) target = $region60
        $region59: #{tpu_custom_call.1} parent=55 // pred_region
          %p409 = scmp.lt.s32.totalorder %s27, 1
          %s410 = scalar_select %p409, %s27, 1
          %s411 = smul.addr %s410, 4
          %s412 = scalar_lea.vmem %s2, %s411
        $region60: #{tpu_custom_call.1} parent=55 // pred_fallthru
          _
        // Predicated region
        $region61: #{tpu_custom_call.1} parent=55 // pred_check
          %p413 = pneg %p139
        $region62: #{tpu_custom_call.1} parent=55 // pred_check_branch
          %415 = sbr.rel (%p413) target = $region64
        $region63: #{tpu_custom_call.1} parent=55 // pred_region
          %p416 = scmp.lt.s32.totalorder %s27, 1
          %s417 = scalar_select %p416, %s27, 1
          %s418 = smul.addr %s417, 4
          %s419 = scalar_lea.vmem %s3, %s418
        $region64: #{tpu_custom_call.1} parent=55 // pred_fallthru
          _
      $region56: #{tpu_custom_call.1} parent=5 // pred_fallthru
        _
    $region6: #{tpu_custom_call.1} parent=1 // loop_footer
      %s20 = sadd.s32 1, %s16
    $region7: #{tpu_custom_call.1} parent=1 // loop_footer_branch
      %15 = sbr.rel target = $region3
    $region8: #{tpu_custom_call.1} parent=1 // loop_exit
      _
    %420 = vsyncpa [#allocation6], 1
    %s421 = scalar_lea.sflag [#allocation6], 1
    %422 = vsyncpa %s421, 1
    %423 = vsyncpa [#allocation8], 1
    %s424 = scalar_lea.sflag [#allocation8], 1
    %425 = vsyncpa %s424, 1

</llo_original>
